<compile_context>
chip_gen: v5e
topology: v5e:2x2
jax: 0.10.0
libtpu: 0.0.40
codegen_flags: <defaults>
</compile_context>

<pallas_src>
import functools

import jax
import jax.numpy as jnp
from jax import lax
from jax.experimental import pallas as pl
from jax.experimental.pallas import tpu as pltpu


def _tuner_kernel(x_ref,
                  w1_ref, b1_ref,
                  w2_ref, b2_ref,
                  w3_ref, b3_ref,
                  w4_ref, b4_ref,
                  o_ref,
                  *, compute_dtype):
    """x_ref: (tile, F); w_i: (out, in) in compute_dtype; b_i: (out, 1) f32;
    o_ref: (4, tile) — batch rides the 128-wide lane axis (lane-dense)."""
    cdt = compute_dtype
    f32 = jnp.float32

    x = x_ref[...].astype(cdt)                                   # (tile, F)

    # Layer 1: contract the feature axis of both operands (A @ Bᵀ, the q·kᵀ
    # pattern) -> (16, tile) lane-dense without any explicit transpose.
    z = lax.dot_general(w1_ref[...], x,
                        dimension_numbers=(((1,), (1,)), ((), ())),
                        preferred_element_type=f32)
    h = jnp.tanh(z + b1_ref[...])                                # (16, tile) f32

    # Layers 2-4: plain (out, K) @ (K, tile) matmuls, cdt operands, f32 acc.
    h = jnp.tanh(jnp.dot(w2_ref[...], h.astype(cdt),
                         preferred_element_type=f32) + b2_ref[...])
    h = jnp.tanh(jnp.dot(w3_ref[...], h.astype(cdt),
                         preferred_element_type=f32) + b3_ref[...])
    h = jnp.tanh(jnp.dot(w4_ref[...], h.astype(cdt),
                         preferred_element_type=f32) + b4_ref[...])   # (4, tile)

    o_ref[...] = (2.0 * h).astype(o_ref.dtype)


def _round_up(x, m):
    return ((x + m - 1) // m) * m


def _forward_impl(x, params, b_tile_max, compute_dtype):
    (w1, b1), (w2, b2), (w3, b3), (w4, b4) = params
    B, F = x.shape
    out_f = w4.shape[0]
    cdt = compute_dtype

    # ---- batch tiling (batch maps to the lane axis inside the kernel) ----
    b_tile_max = max(128, (int(b_tile_max) // 128) * 128)        # multiple of 128
    if B < 256:
        tile, num_tiles = B, 1                                   # one full block
    else:
        # Balanced tiles (don't pad ~a full tile) and >= 2 grid steps so the
        # "parallel" batch axis can feed both v7x TensorCores.
        num_tiles = max(pl.cdiv(B, b_tile_max), 2)
        tile = _round_up(pl.cdiv(B, num_tiles), 128)
        num_tiles = pl.cdiv(B, tile)

    # ---- tiny parameter-layout plumbing (a few hundred bytes) ----
    w1c, w2c, w3c, w4c = (w.astype(cdt) for w in (w1, w2, w3, w4))
    b1c, b2c, b3c, b4c = (b.reshape(-1, 1).astype(jnp.float32)
                          for b in (b1, b2, b3, b4))

    resident = lambda a: pl.BlockSpec(a.shape, lambda i: (0, 0))  # VMEM-resident

    flops = 2 * B * (F * 16 + 16 * 16 + 16 * 16 + 16 * out_f)
    cost = pl.CostEstimate(flops=flops,
                           transcendentals=B * (16 + 16 + 16 + out_f),
                           bytes_accessed=B * (F + out_f) * 4 + 2048)

    kernel = functools.partial(_tuner_kernel, compute_dtype=cdt)

    out_t = pl.pallas_call(
        kernel,
        out_shape=jax.ShapeDtypeStruct((out_f, B), jnp.float32),
        grid_spec=pltpu.PrefetchScalarGridSpec(
            num_scalar_prefetch=0,
            grid=(num_tiles,),
            in_specs=[
                pl.BlockSpec((tile, F), lambda i: (i, 0)),        # x batch tile
                resident(w1c), resident(b1c),
                resident(w2c), resident(b2c),
                resident(w3c), resident(b3c),
                resident(w4c), resident(b4c),
            ],
            out_specs=pl.BlockSpec((out_f, tile), lambda i: (0, i)),
        ),
        compiler_params=pltpu.CompilerParams(
            dimension_semantics=("parallel",),                    # v7x megacore
            vmem_limit_bytes=16 << 20,                            # << 64 MiB v7x VMEM
        ),
        cost_estimate=cost,
    )(x, w1c, b1c, w2c, b2c, w3c, b3c, w4c, b4c)

    return out_t                                                  # (4, B) lane-dense


@functools.partial(jax.jit, static_argnames=("b_tile_max", "compute_dtype"))
def tuner_coordinates_v1_forward_t(x, params, *, b_tile_max=2048,
                                   compute_dtype=jnp.bfloat16):
    """Kernel-native output layout (4, B): no extra HBM pass at all."""
    return _forward_impl(x, params, b_tile_max, compute_dtype)


@functools.partial(jax.jit, static_argnames=("b_tile_max", "compute_dtype"))
def tuner_coordinates_v1_forward(x, params, *, b_tile_max=2048,
                                 compute_dtype=jnp.bfloat16):
    """Module-facing forward: x (B, 4*ar) -> (B, 4) = 2 * tanh(MLP(x))."""
    return _forward_impl(x, params, b_tile_max, compute_dtype).T


def init_params(key, ar=3):
    """PyTorch nn.Linear-style init: weights (out, in), biases (out,)."""
    dims = [(4 * ar, 16), (16, 16), (16, 16), (16, 4)]
    params = []
    for fan_in, fan_out in dims:
        key, kw, kb = jax.random.split(key, 3)
        bound = 1.0 / (fan_in ** 0.5)
        w = jax.random.uniform(kw, (fan_out, fan_in), jnp.float32, -bound, bound)
        b = jax.random.uniform(kb, (fan_out,), jnp.float32, -bound, bound)
        params.append((w, b))
    return params


def reference_forward(x, params, compute_dtype=jnp.float32):
    """Pure-JAX reference; compute_dtype mirrors the kernel's operand casts."""
    h = x
    for (w, b) in params:
        z = jnp.dot(h.astype(compute_dtype), w.astype(compute_dtype).T,
                    preferred_element_type=jnp.float32) + b.reshape(1, -1)
        h = jnp.tanh(z)
    return 2.0 * h


if __name__ == "__main__":
    key = jax.random.PRNGKey(0)
    key, kx = jax.random.split(key)

    ar = 3
    B = 8
    x = jax.random.normal(kx, (B, 4 * ar), jnp.float32)
    params = init_params(key, ar=ar)

    ref32 = reference_forward(x, params)

    # Exact-parity path (f32 operands end to end).
    out32 = jax.block_until_ready(
        tuner_coordinates_v1_forward(x, params, compute_dtype=jnp.float32))
    assert out32.shape == (B, 4)
    assert jnp.allclose(out32, ref32, rtol=1e-5, atol=1e-5), "f32 kernel mismatch"

    # Default fast path: bf16 MXU operands, f32 accumulation.
    out_bf = jax.block_until_ready(tuner_coordinates_v1_forward(x, params))
    assert out_bf.shape == (B, 4)
    assert jnp.allclose(out_bf, reference_forward(x, params, jnp.bfloat16),
                        rtol=0, atol=2e-2), "bf16 kernel mismatch vs bf16 reference"
    assert jnp.allclose(out_bf, ref32, atol=2e-1), "bf16 kernel far from f32 reference"

    # Multi-tile / partial-block / two-TensorCore path (B not a tile multiple).
    key, kx2 = jax.random.split(key)
    x2 = jax.random.normal(kx2, (300, 4 * ar), jnp.float32)
    out2 = jax.block_until_ready(
        tuner_coordinates_v1_forward(x2, params, b_tile_max=128))
    assert out2.shape == (300, 4)
    assert jnp.allclose(out2, reference_forward(x2, params, jnp.bfloat16),
                        rtol=0, atol=2e-2), "multi-tile bf16 kernel mismatch"

    print("KERNEL_OK")
</pallas_src>

<mosaic_0001>
module attributes {stable_mosaic.version = 11 : i64} {
  func.func @_tuner_kernel(%arg0: i32, %arg1: memref<8x12xf32, #tpu.memory_space<vmem>>, %arg2: memref<16x12xf32, #tpu.memory_space<vmem>>, %arg3: memref<16x1xf32, #tpu.memory_space<vmem>>, %arg4: memref<16x16xf32, #tpu.memory_space<vmem>>, %arg5: memref<16x1xf32, #tpu.memory_space<vmem>>, %arg6: memref<16x16xf32, #tpu.memory_space<vmem>>, %arg7: memref<16x1xf32, #tpu.memory_space<vmem>>, %arg8: memref<4x16xf32, #tpu.memory_space<vmem>>, %arg9: memref<4x1xf32, #tpu.memory_space<vmem>>, %arg10: memref<4x8xf32, #tpu.memory_space<vmem>>) attributes {dimension_semantics = [#tpu.dimension_semantics<parallel>], iteration_bounds = array<i64: 1>, scalar_prefetch = 0 : i64, scratch_operands = 0 : i64, tpu.core_type = #tpu.core_type<tc>, window_params = [{transform_indices = @transform_0, window_bounds = array<i64: 8, 12>}, {pipeline_mode = #tpu.pipeline_mode<synchronous>, transform_indices = @transform_1, window_bounds = array<i64: 16, 12>}, {pipeline_mode = #tpu.pipeline_mode<synchronous>, transform_indices = @transform_2, window_bounds = array<i64: 16, 1>}, {pipeline_mode = #tpu.pipeline_mode<synchronous>, transform_indices = @transform_3, window_bounds = array<i64: 16, 16>}, {pipeline_mode = #tpu.pipeline_mode<synchronous>, transform_indices = @transform_4, window_bounds = array<i64: 16, 1>}, {pipeline_mode = #tpu.pipeline_mode<synchronous>, transform_indices = @transform_5, window_bounds = array<i64: 16, 16>}, {pipeline_mode = #tpu.pipeline_mode<synchronous>, transform_indices = @transform_6, window_bounds = array<i64: 16, 1>}, {pipeline_mode = #tpu.pipeline_mode<synchronous>, transform_indices = @transform_7, window_bounds = array<i64: 4, 16>}, {pipeline_mode = #tpu.pipeline_mode<synchronous>, transform_indices = @transform_8, window_bounds = array<i64: 4, 1>}, {transform_indices = @transform_9, window_bounds = array<i64: 4, 8>}]} {
    %c0 = arith.constant 0 : index
    %c0_0 = arith.constant 0 : index
    %0 = vector.load %arg1[%c0, %c0_0] : memref<8x12xf32, #tpu.memory_space<vmem>>, vector<8x12xf32>
    %c0_1 = arith.constant 0 : index
    %c0_2 = arith.constant 0 : index
    %1 = vector.load %arg2[%c0_1, %c0_2] : memref<16x12xf32, #tpu.memory_space<vmem>>, vector<16x12xf32>
    %cst = arith.constant dense<0.000000e+00> : vector<16x8xf32>
    %2 = tpu.matmul %1, %0, %cst {dimension_numbers = #tpu.dot_dimension_numbers<[1], [1], [0], [0], [0, 0, 1, 0], [], []>} : vector<16x12xf32>, vector<8x12xf32>, vector<16x8xf32> -> vector<16x8xf32>
    %c0_3 = arith.constant 0 : index
    %c0_4 = arith.constant 0 : index
    %3 = vector.load %arg3[%c0_3, %c0_4] : memref<16x1xf32, #tpu.memory_space<vmem>>, vector<16x1xf32>
    %4 = vector.broadcast %3 : vector<16x1xf32> to vector<16x8xf32>
    %5 = arith.addf %2, %4 : vector<16x8xf32>
    %6 = math.tanh %5 : vector<16x8xf32>
    %c0_5 = arith.constant 0 : index
    %c0_6 = arith.constant 0 : index
    %7 = vector.load %arg4[%c0_5, %c0_6] : memref<16x16xf32, #tpu.memory_space<vmem>>, vector<16x16xf32>
    %cst_7 = arith.constant dense<0.000000e+00> : vector<16x8xf32>
    %8 = tpu.matmul %7, %6, %cst_7 {dimension_numbers = #tpu.dot_dimension_numbers<[1], [0], [0], [1], [0, 0, 1, 1], [], []>} : vector<16x16xf32>, vector<16x8xf32>, vector<16x8xf32> -> vector<16x8xf32>
    %c0_8 = arith.constant 0 : index
    %c0_9 = arith.constant 0 : index
    %9 = vector.load %arg5[%c0_8, %c0_9] : memref<16x1xf32, #tpu.memory_space<vmem>>, vector<16x1xf32>
    %10 = vector.broadcast %9 : vector<16x1xf32> to vector<16x8xf32>
    %11 = arith.addf %8, %10 : vector<16x8xf32>
    %12 = math.tanh %11 : vector<16x8xf32>
    %c0_10 = arith.constant 0 : index
    %c0_11 = arith.constant 0 : index
    %13 = vector.load %arg6[%c0_10, %c0_11] : memref<16x16xf32, #tpu.memory_space<vmem>>, vector<16x16xf32>
    %cst_12 = arith.constant dense<0.000000e+00> : vector<16x8xf32>
    %14 = tpu.matmul %13, %12, %cst_12 {dimension_numbers = #tpu.dot_dimension_numbers<[1], [0], [0], [1], [0, 0, 1, 1], [], []>} : vector<16x16xf32>, vector<16x8xf32>, vector<16x8xf32> -> vector<16x8xf32>
    %c0_13 = arith.constant 0 : index
    %c0_14 = arith.constant 0 : index
    %15 = vector.load %arg7[%c0_13, %c0_14] : memref<16x1xf32, #tpu.memory_space<vmem>>, vector<16x1xf32>
    %16 = vector.broadcast %15 : vector<16x1xf32> to vector<16x8xf32>
    %17 = arith.addf %14, %16 : vector<16x8xf32>
    %18 = math.tanh %17 : vector<16x8xf32>
    %c0_15 = arith.constant 0 : index
    %c0_16 = arith.constant 0 : index
    %19 = vector.load %arg8[%c0_15, %c0_16] : memref<4x16xf32, #tpu.memory_space<vmem>>, vector<4x16xf32>
    %cst_17 = arith.constant dense<0.000000e+00> : vector<4x8xf32>
    %20 = tpu.matmul %19, %18, %cst_17 {dimension_numbers = #tpu.dot_dimension_numbers<[1], [0], [0], [1], [0, 0, 1, 1], [], []>} : vector<4x16xf32>, vector<16x8xf32>, vector<4x8xf32> -> vector<4x8xf32>
    %c0_18 = arith.constant 0 : index
    %c0_19 = arith.constant 0 : index
    %21 = vector.load %arg9[%c0_18, %c0_19] : memref<4x1xf32, #tpu.memory_space<vmem>>, vector<4x1xf32>
    %22 = vector.broadcast %21 : vector<4x1xf32> to vector<4x8xf32>
    %23 = arith.addf %20, %22 : vector<4x8xf32>
    %24 = math.tanh %23 : vector<4x8xf32>
    %cst_20 = arith.constant 2.000000e+00 : f32
    %25 = vector.broadcast %cst_20 : f32 to vector<4x8xf32>
    %26 = arith.mulf %25, %24 : vector<4x8xf32>
    %c0_21 = arith.constant 0 : index
    %c0_22 = arith.constant 0 : index
    %27 = vector.load %arg10[%c0_21, %c0_22] : memref<4x8xf32, #tpu.memory_space<vmem>>, vector<4x8xf32>
    tpu.vector_store %arg10[%c0_21, %c0_22], %26 {strides = array<i32>} : memref<4x8xf32, #tpu.memory_space<vmem>>, vector<4x8xf32>,
    return
  }
  func.func @transform_0(%arg0: i32) -> (i32, i32) {
    %c0_i32 = arith.constant 0 : i32
    %c0_i32_0 = arith.constant 0 : i32
    return %arg0, %c0_i32 : i32, i32
  }
  func.func @transform_1(%arg0: i32) -> (i32, i32) {
    %c0_i32 = arith.constant 0 : i32
    %c0_i32_0 = arith.constant 0 : i32
    %c0_i32_1 = arith.constant 0 : i32
    return %c0_i32, %c0_i32_0 : i32, i32
  }
  func.func @transform_2(%arg0: i32) -> (i32, i32) {
    %c0_i32 = arith.constant 0 : i32
    %c0_i32_0 = arith.constant 0 : i32
    %c0_i32_1 = arith.constant 0 : i32
    return %c0_i32, %c0_i32_0 : i32, i32
  }
  func.func @transform_3(%arg0: i32) -> (i32, i32) {
    %c0_i32 = arith.constant 0 : i32
    %c0_i32_0 = arith.constant 0 : i32
    %c0_i32_1 = arith.constant 0 : i32
    return %c0_i32, %c0_i32_0 : i32, i32
  }
  func.func @transform_4(%arg0: i32) -> (i32, i32) {
    %c0_i32 = arith.constant 0 : i32
    %c0_i32_0 = arith.constant 0 : i32
    %c0_i32_1 = arith.constant 0 : i32
    return %c0_i32, %c0_i32_0 : i32, i32
  }
  func.func @transform_5(%arg0: i32) -> (i32, i32) {
    %c0_i32 = arith.constant 0 : i32
    %c0_i32_0 = arith.constant 0 : i32
    %c0_i32_1 = arith.constant 0 : i32
    return %c0_i32, %c0_i32_0 : i32, i32
  }
  func.func @transform_6(%arg0: i32) -> (i32, i32) {
    %c0_i32 = arith.constant 0 : i32
    %c0_i32_0 = arith.constant 0 : i32
    %c0_i32_1 = arith.constant 0 : i32
    return %c0_i32, %c0_i32_0 : i32, i32
  }
  func.func @transform_7(%arg0: i32) -> (i32, i32) {
    %c0_i32 = arith.constant 0 : i32
    %c0_i32_0 = arith.constant 0 : i32
    %c0_i32_1 = arith.constant 0 : i32
    return %c0_i32, %c0_i32_0 : i32, i32
  }
  func.func @transform_8(%arg0: i32) -> (i32, i32) {
    %c0_i32 = arith.constant 0 : i32
    %c0_i32_0 = arith.constant 0 : i32
    %c0_i32_1 = arith.constant 0 : i32
    return %c0_i32, %c0_i32_0 : i32, i32
  }
  func.func @transform_9(%arg0: i32) -> (i32, i32) {
    %c0_i32 = arith.constant 0 : i32
    %c0_i32_0 = arith.constant 0 : i32
    return %c0_i32, %arg0 : i32, i32
  }
}

</mosaic_0001>

<llo_original>
// kernel: tuner_coordinates_v1_forward.1
$region0: #{tuner_coordinates_v1_forward.1}
  #allocation0 [shape = 'u32[]', space=smem, size = 0x4, offset = 0x4, fixed_abs, tag = 'smem constant byte address 0x4 - core index']
  #allocation1 [shape = 'u32[72,128]{1,0:T(1,128)}', space=vmem, size = 0x9000, scoped, tag = 'internal scratch']
  %s0 = inlined_call_operand.vmem [shape: f32[8,12], index: 0, kind: input, shape index: {}]
  %s1 = inlined_call_operand.vmem [shape: f32[16,12], index: 1, kind: input, shape index: {}]
  %s2 = inlined_call_operand.vmem [shape: f32[16,1], index: 2, kind: input, shape index: {}]
  %s3 = inlined_call_operand.vmem [shape: f32[16,16], index: 3, kind: input, shape index: {}]
  %s4 = inlined_call_operand.vmem [shape: f32[16,1], index: 4, kind: input, shape index: {}]
  %s5 = inlined_call_operand.vmem [shape: f32[16,16], index: 5, kind: input, shape index: {}]
  %s6 = inlined_call_operand.vmem [shape: f32[16,1], index: 6, kind: input, shape index: {}]
  %s7 = inlined_call_operand.vmem [shape: f32[4,16], index: 7, kind: input, shape index: {}]
  %s8 = inlined_call_operand.vmem [shape: f32[4,1], index: 8, kind: input, shape index: {}]
  %s9 = inlined_call_operand.hbm [shape: f32[4,8], index: 9, kind: output, shape index: {}]
  %s10 = sld [smem:[#allocation0]]
  $region46: #{tuner_coordinates_v1_forward.1} parent=0
    _
  %s12 = ssub.s32 1, %s10
  %s13 = scalar_select 0, %s12, %s10
  $region1: #{tuner_coordinates_v1_forward.1} parent=0
    #allocation2 [shape = 'u8[2048]{0}', space=vmem, size = 0x800, scoped, tag = 'output window, operand 0, single buffered']
    #allocation3 [shape = 's32[1]{0}', space=sflag, size = 0x4, scoped, tag = 'scoped memory for tuner_coordinates_v1_forward.1']
    %14 = vsyncpa [#allocation3], 0
    // Predicated region
    $region2: #{tuner_coordinates_v1_forward.1} parent=1 // pred_check
      _
    $region3: #{tuner_coordinates_v1_forward.1} parent=1 // pred_check_branch
      %16 = sbr.rel (0) target = $region5
    $region4: #{tuner_coordinates_v1_forward.1} parent=1 // pred_region
      _
    $region5: #{tuner_coordinates_v1_forward.1} parent=1 // pred_fallthru
      _
    // Predicated region
    $region6: #{tuner_coordinates_v1_forward.1} parent=1 // pred_check
      _
    $region7: #{tuner_coordinates_v1_forward.1} parent=1 // pred_check_branch
      %18 = sbr.rel (0) target = $region9
    $region8: #{tuner_coordinates_v1_forward.1} parent=1 // pred_region
      _
    $region9: #{tuner_coordinates_v1_forward.1} parent=1 // pred_fallthru
      _
    // Predicated region
    $region10: #{tuner_coordinates_v1_forward.1} parent=1 // pred_check
      _
    $region11: #{tuner_coordinates_v1_forward.1} parent=1 // pred_check_branch
      %20 = sbr.rel (0) target = $region13
    $region12: #{tuner_coordinates_v1_forward.1} parent=1 // pred_region
      _
    $region13: #{tuner_coordinates_v1_forward.1} parent=1 // pred_fallthru
      _
    // Predicated region
    $region14: #{tuner_coordinates_v1_forward.1} parent=1 // pred_check
      _
    $region15: #{tuner_coordinates_v1_forward.1} parent=1 // pred_check_branch
      %22 = sbr.rel (0) target = $region17
    $region16: #{tuner_coordinates_v1_forward.1} parent=1 // pred_region
      _
    $region17: #{tuner_coordinates_v1_forward.1} parent=1 // pred_fallthru
      _
    // Predicated region
    $region18: #{tuner_coordinates_v1_forward.1} parent=1 // pred_check
      _
    $region19: #{tuner_coordinates_v1_forward.1} parent=1 // pred_check_branch
      %24 = sbr.rel (0) target = $region21
    $region20: #{tuner_coordinates_v1_forward.1} parent=1 // pred_region
      _
    $region21: #{tuner_coordinates_v1_forward.1} parent=1 // pred_fallthru
      _
    // Predicated region
    $region22: #{tuner_coordinates_v1_forward.1} parent=1 // pred_check
      _
    $region23: #{tuner_coordinates_v1_forward.1} parent=1 // pred_check_branch
      %26 = sbr.rel (0) target = $region25
    $region24: #{tuner_coordinates_v1_forward.1} parent=1 // pred_region
      _
    $region25: #{tuner_coordinates_v1_forward.1} parent=1 // pred_fallthru
      _
    // Predicated region
    $region26: #{tuner_coordinates_v1_forward.1} parent=1 // pred_check
      _
    $region27: #{tuner_coordinates_v1_forward.1} parent=1 // pred_check_branch
      %28 = sbr.rel (0) target = $region29
    $region28: #{tuner_coordinates_v1_forward.1} parent=1 // pred_region
      _
    $region29: #{tuner_coordinates_v1_forward.1} parent=1 // pred_fallthru
      _
    // Predicated region
    $region30: #{tuner_coordinates_v1_forward.1} parent=1 // pred_check
      _
    $region31: #{tuner_coordinates_v1_forward.1} parent=1 // pred_check_branch
      %30 = sbr.rel (0) target = $region33
    $region32: #{tuner_coordinates_v1_forward.1} parent=1 // pred_region
      _
    $region33: #{tuner_coordinates_v1_forward.1} parent=1 // pred_fallthru
      _
    // Predicated region
    $region34: #{tuner_coordinates_v1_forward.1} parent=1 // pred_check
      _
    $region35: #{tuner_coordinates_v1_forward.1} parent=1 // pred_check_branch
      %32 = sbr.rel (0) target = $region37
    $region36: #{tuner_coordinates_v1_forward.1} parent=1 // pred_region
      _
    $region37: #{tuner_coordinates_v1_forward.1} parent=1 // pred_fallthru
      _
    %v33 = vld [vmem:[%s0] sm:$0xff]
    %v34 = vld [vmem:[%s1] sm:$0xff]
    %v35 = vld [vmem:[%s1 + $0x8] sm:$0xff]
    %v36 = vld [vmem:[%s2] sm:$0xff]
    %v37 = vld [vmem:[%s2 + $0x8] sm:$0xff]
    %39 = vset.pattern.permute.xlu0 0
    %40 = vperm.xlu0 %39, %v36
    %v41 = vpop.permute.xlu0 %40
    %44 = vset.pattern.permute.xlu0 0
    %45 = vperm.xlu0 %44, %v37
    %v46 = vpop.permute.xlu0 %45
    %vm48 = vcmask 97280
    %v50 = vsel %vm48, %v34, 0
    %v53 = vsel %vm48, %v35, 0
    %v56 = vsel %vm48, %v33, 0
    %58 = vmatpush.xpose.msra.mxu0 0.0
    %59 = vmatpush.xpose.msra.mxu0 0.0
    %60 = vmatpush.xpose.msra.mxu0 0.0
    %61 = vmatpush.xpose.msra.mxu0 0.0
    %62 = vmatpush.xpose.msra.mxu0 0.0
    %63 = vmatpush.xpose.msra.mxu0 0.0
    %64 = vmatpush.xpose.msra.mxu0 0.0
    %65 = vmatpush.xpose.msra.mxu0 0.0
    %66 = vmatpush.xpose.msra.mxu0 0.0
    %67 = vmatpush.xpose.msra.mxu0 0.0
    %68 = vmatpush.xpose.msra.mxu0 0.0
    %69 = vmatpush.xpose.msra.mxu0 0.0
    %70 = vmatpush.xpose.msra.mxu0 0.0
    %71 = vmatpush.xpose.msra.mxu0 0.0
    %72 = vmatpush.xpose.msra.mxu0 0.0
    %73 = vmatpush.xpose.msra.mxu0 %v56
    %74 = vmatmul.f32.gmra.mxu0 %v50
    %v75 = vpop.f32.mrf.mxu0
    %v76 = vadd.f32 %v41, %v75
    %77 = vmatmul.f32.gmra.mxu0 %v53
    %v78 = vpop.f32.mrf.mxu0
    %v79 = vadd.f32 %v46, %v78
    %80 = vdwg.mxu0
    %v81 = vtanh.pop %v76
    %v82 = vtanh.pop %v79
    %v83 = vld [vmem:[%s3] sm:$0xff]
    %v84 = vld [vmem:[%s3 + $0x8] sm:$0xff]
    %v85 = vld [vmem:[%s4] sm:$0xff]
    %v86 = vld [vmem:[%s4 + $0x8] sm:$0xff]
    %88 = vset.pattern.permute.xlu0 0
    %89 = vperm.xlu0 %88, %v85
    %v90 = vpop.permute.xlu0 %89
    %93 = vset.pattern.permute.xlu0 0
    %94 = vperm.xlu0 %93, %v86
    %v95 = vpop.permute.xlu0 %94
    %vm97 = vcmask 130048
    %v99 = vsel %vm97, %v83, 0
    %v102 = vsel %vm97, %v84, 0
    %104 = vmatpush.msra.mxu0 0.0
    %105 = vmatpush.msra.mxu0 0.0
    %106 = vmatpush.msra.mxu0 0.0
    %107 = vmatpush.msra.mxu0 0.0
    %108 = vmatpush.msra.mxu0 0.0
    %109 = vmatpush.msra.mxu0 0.0
    %110 = vmatpush.msra.mxu0 0.0
    %111 = vmatpush.msra.mxu0 0.0
    %112 = vmatpush.msra.mxu0 0.0
    %113 = vmatpush.msra.mxu0 0.0
    %114 = vmatpush.msra.mxu0 0.0
    %115 = vmatpush.msra.mxu0 0.0
    %116 = vmatpush.msra.mxu0 0.0
    %117 = vmatpush.msra.mxu0 0.0
    %118 = vmatpush.msra.mxu0 %v82
    %119 = vmatpush.msra.mxu0 %v81
    %120 = vmatmul.f32.gmra.mxu0 %v99
    %v121 = vpop.f32.mrf.mxu0
    %v122 = vadd.f32 %v90, %v121
    %123 = vmatmul.f32.gmra.mxu0 %v102
    %v124 = vpop.f32.mrf.mxu0
    %v125 = vadd.f32 %v95, %v124
    %126 = vdwg.mxu0
    %v127 = vtanh.pop %v122
    %v128 = vtanh.pop %v125
    %v129 = vld [vmem:[%s5] sm:$0xff]
    %v130 = vld [vmem:[%s5 + $0x8] sm:$0xff]
    %v131 = vld [vmem:[%s6] sm:$0xff]
    %v132 = vld [vmem:[%s6 + $0x8] sm:$0xff]
    %134 = vset.pattern.permute.xlu0 0
    %135 = vperm.xlu0 %134, %v131
    %v136 = vpop.permute.xlu0 %135
    %139 = vset.pattern.permute.xlu0 0
    %140 = vperm.xlu0 %139, %v132
    %v141 = vpop.permute.xlu0 %140
    %v144 = vsel %vm97, %v129, 0
    %v147 = vsel %vm97, %v130, 0
    %149 = vmatpush.msra.mxu0 0.0
    %150 = vmatpush.msra.mxu0 0.0
    %151 = vmatpush.msra.mxu0 0.0
    %152 = vmatpush.msra.mxu0 0.0
    %153 = vmatpush.msra.mxu0 0.0
    %154 = vmatpush.msra.mxu0 0.0
    %155 = vmatpush.msra.mxu0 0.0
    %156 = vmatpush.msra.mxu0 0.0
    %157 = vmatpush.msra.mxu0 0.0
    %158 = vmatpush.msra.mxu0 0.0
    %159 = vmatpush.msra.mxu0 0.0
    %160 = vmatpush.msra.mxu0 0.0
    %161 = vmatpush.msra.mxu0 0.0
    %162 = vmatpush.msra.mxu0 0.0
    %163 = vmatpush.msra.mxu0 %v128
    %164 = vmatpush.msra.mxu0 %v127
    %165 = vmatmul.f32.gmra.mxu0 %v144
    %v166 = vpop.f32.mrf.mxu0
    %v167 = vadd.f32 %v136, %v166
    %168 = vmatmul.f32.gmra.mxu0 %v147
    %v169 = vpop.f32.mrf.mxu0
    %v170 = vadd.f32 %v141, %v169
    %171 = vdwg.mxu0
    %v172 = vtanh.pop %v167
    %v173 = vtanh.pop %v170
    %v174 = vld [vmem:[%s7] sm:$0xf]
    %v175 = vld [vmem:[%s8] sm:$0xf]
    %177 = vset.pattern.permute.xlu0 0
    %178 = vperm.xlu0 %177, %v175
    %v179 = vpop.permute.xlu0 %178
    %v182 = vsel %vm97, %v174, 0
    %184 = vmatpush.msra.mxu0 0.0
    %185 = vmatpush.msra.mxu0 0.0
    %186 = vmatpush.msra.mxu0 0.0
    %187 = vmatpush.msra.mxu0 0.0
    %188 = vmatpush.msra.mxu0 0.0
    %189 = vmatpush.msra.mxu0 0.0
    %190 = vmatpush.msra.mxu0 0.0
    %191 = vmatpush.msra.mxu0 0.0
    %192 = vmatpush.msra.mxu0 0.0
    %193 = vmatpush.msra.mxu0 0.0
    %194 = vmatpush.msra.mxu0 0.0
    %195 = vmatpush.msra.mxu0 0.0
    %196 = vmatpush.msra.mxu0 0.0
    %197 = vmatpush.msra.mxu0 0.0
    %198 = vmatpush.msra.mxu0 %v173
    %199 = vmatpush.msra.mxu0 %v172
    %200 = vmatmul.f32.gmra.mxu0 %v182
    %v201 = vpop.f32.mrf.mxu0
    %v202 = vadd.f32 %v179, %v201
    %203 = vdwg.mxu0
    %v204 = vtanh.pop %v202
    %v205 = vmul.f32 %v204, 2.0
    %vm206 = vcmask 60416
    %207 = vst.msk [vmem:[#allocation2] sm:$0xf] %vm206, %v205
    // Predicated region
    $region38: #{tuner_coordinates_v1_forward.1} parent=1 // pred_check
      _
    $region39: #{tuner_coordinates_v1_forward.1} parent=1 // pred_check_branch
      %209 = sbr.rel (0) target = $region41
    $region40: #{tuner_coordinates_v1_forward.1} parent=1 // pred_region
      %211 = vsyncadd [#allocation3], 0
      %s213 = sshll.u32 [#allocation2], 4
      %s214 = int_to_ptr.vmem [resolvable:$true] %s213
      %s215 = sshll.u32 %s9, 4
      %s216 = int_to_ptr.hbm [resolvable:$true] %s215
      %218 = dma.vmem_to_hbm [thread:$0]  %s214, 64, %s216, [#allocation3]
    $region41: #{tuner_coordinates_v1_forward.1} parent=1 // pred_fallthru
      _
    // Predicated region
    $region42: #{tuner_coordinates_v1_forward.1} parent=1 // pred_check
      _
    $region43: #{tuner_coordinates_v1_forward.1} parent=1 // pred_check_branch
      %220 = sbr.rel (0) target = $region45
    $region44: #{tuner_coordinates_v1_forward.1} parent=1 // pred_region
      %222 = dma.done [#allocation3], 64
    $region45: #{tuner_coordinates_v1_forward.1} parent=1 // pred_fallthru
      _
    %223 = vsyncpa [#allocation3], 1

</llo_original>
